<compile_context>
chip_gen: v7x
topology: tpu7x:2x2x1
jax: 0.10.0
libtpu: 0.0.40
codegen_flags: <defaults>
</compile_context>

<pallas_src>
import functools

import jax
import jax.numpy as jnp
from jax.experimental import pallas as pl
from jax.experimental.pallas import tpu as pltpu

LANES = 128
TARGET_BLOCK_BYTES = 4 << 20      # ~4 MiB of input streamed per grid step


def _reference_hinge(real, fake):
    r = real.astype(jnp.float32)
    f = fake.astype(jnp.float32)
    return jnp.mean(jnp.maximum(1.0 - r, 0.0)) + jnp.mean(jnp.maximum(1.0 + f, 0.0))


def _accumulate(x_ref, sign, is_active, i, n_tiles, rows, tile, acc_ref):
    """Add relu(1 + sign*x) sublane-partials of the current tile into acc_ref."""

    def add(mask_tail):
        def body():
            x = x_ref[...].astype(jnp.float32)
            v = jnp.maximum(1.0 + sign * x, 0.0)
            if mask_tail:
                # Ragged tail tile: rows past the slab extent are a Pallas
                # partial-block read (garbage) -> zero them.
                row = jax.lax.broadcasted_iota(jnp.int32, v.shape, 0)
                v = jnp.where(row < rows - i * tile, v, 0.0)
            if tile % 8 == 0:
                # Pure VPU adds: fold tile into (8,128) sublane partials.
                acc_ref[...] += jnp.sum(v.reshape(-1, 8, LANES), axis=0)
            else:
                # Single full-array block with <8-aligned rows: one XLU reduce.
                acc_ref[0:1, :] = acc_ref[0:1, :] + jnp.sum(v, axis=0, keepdims=True)
        return body

    in_range = jnp.logical_and(is_active, i < n_tiles)
    if rows % tile != 0:  # static: this tensor has a ragged last tile
        pl.when(jnp.logical_and(in_range, i < n_tiles - 1))(add(False))
        pl.when(jnp.logical_and(in_range, i == n_tiles - 1))(add(True))
    else:
        pl.when(in_range)(add(False))


def _hinge_kernel(real_ref, fake_ref, out_ref, acc_ref, *,
                  grid_r, grid_f, rows_r, rows_f, tile_r, tile_f, inv_r, inv_f):
    t = pl.program_id(0)          # 0 -> real term, 1 -> fake term
    i = pl.program_id(1)          # tile index within the selected tensor

    @pl.when(i == 0)
    def _():
        acc_ref[...] = jnp.zeros_like(acc_ref)

    _accumulate(real_ref, -1.0, t == 0, i, grid_r, rows_r, tile_r, acc_ref)
    _accumulate(fake_ref, +1.0, t == 1, i, grid_f, rows_f, tile_f, acc_ref)

    @pl.when(i == pl.num_programs(1) - 1)
    def _():
        scale = jnp.where(t == 0, jnp.float32(inv_r), jnp.float32(inv_f))
        out_ref[...] = acc_ref[...] * scale   # full (8,128) lane-dense store


def _as_slab(x, pad_val):
    """Flatten to a lane-dense (rows, 128) slab in the ORIGINAL dtype.

    Pads (with a neutral value that contributes exactly 0 to the loss) only
    when the element count is not a multiple of 128; ragged tile tails are
    masked inside the kernel instead of padded.
    """
    flat = x.reshape(-1)
    rem = flat.size % LANES
    if rem:
        flat = jnp.pad(flat, (0, LANES - rem), constant_values=x.dtype.type(pad_val))
    return flat.reshape(-1, LANES)


def _tile_plan(rows, itemsize):
    """Pick a tile row-count: ~TARGET bytes per DMA, (8,128)-legal block."""
    target_rows = max(8, TARGET_BLOCK_BYTES // (LANES * itemsize))
    target_rows -= target_rows % 8
    tile = rows if rows <= target_rows else target_rows  # full-extent or 8-aligned
    return tile, pl.cdiv(rows, tile)


@functools.partial(jax.jit, static_argnames=("target_block_bytes",))
def hinge_loss(real, fake, *, target_block_bytes=TARGET_BLOCK_BYTES):
    if real.size == 0 or fake.size == 0:
        # mean of an empty tensor -> NaN (matches torch); kernel needs >= 1 elem.
        return _reference_hinge(real, fake)

    r2 = _as_slab(real, 1.0)     # relu(1 - 1)    == 0  -> neutral pad
    f2 = _as_slab(fake, -1.0)    # relu(1 + (-1)) == 0  -> neutral pad
    rows_r, rows_f = r2.shape[0], f2.shape[0]

    def plan(rows, itemsize):
        tgt = max(8, target_block_bytes // (LANES * itemsize))
        tgt -= tgt % 8
        tile = rows if rows <= tgt else tgt
        return tile, pl.cdiv(rows, tile)

    tile_r, grid_r = plan(rows_r, real.dtype.itemsize)
    tile_f, grid_f = plan(rows_f, fake.dtype.itemsize)
    n_steps = max(grid_r, grid_f)

    kernel = functools.partial(
        _hinge_kernel,
        grid_r=grid_r, grid_f=grid_f, rows_r=rows_r, rows_f=rows_f,
        tile_r=tile_r, tile_f=tile_f,
        inv_r=1.0 / float(real.size), inv_f=1.0 / float(fake.size))

    # Each tensor streams only during its own phase of the leading axis; the
    # inactive tensor's block index is pinned so its DMA is never re-issued.
    # TODO(synk): for heavily skewed real/fake sizes on v7x, split each
    # tensor's tile range across the two cores instead of core-per-tensor.
    def real_map(t, i):
        return (jnp.where(t == 0, jnp.minimum(i, grid_r - 1), grid_r - 1), 0)

    def fake_map(t, i):
        return (jnp.where(t == 1, jnp.minimum(i, grid_f - 1), 0), 0)

    block_bytes = (tile_r * LANES * real.dtype.itemsize
                   + tile_f * LANES * fake.dtype.itemsize)
    vmem_limit = min(2 * block_bytes + (8 << 20), 48 << 20)

    out = pl.pallas_call(
        kernel,
        out_shape=jax.ShapeDtypeStruct((2 * 8, LANES), jnp.float32),
        grid_spec=pltpu.PrefetchScalarGridSpec(
            num_scalar_prefetch=0,
            grid=(2, n_steps),
            in_specs=[
                pl.BlockSpec((tile_r, LANES), real_map),
                pl.BlockSpec((tile_f, LANES), fake_map),
            ],
            out_specs=pl.BlockSpec((8, LANES), lambda t, i: (t, 0)),
            scratch_shapes=[pltpu.VMEM((8, LANES), jnp.float32)],
        ),
        compiler_params=pltpu.CompilerParams(
            dimension_semantics=("parallel", "arbitrary"),
            vmem_limit_bytes=vmem_limit,
        ),
    )(r2, f2)

    # Rows 0-7: scaled real-term partials, rows 8-15: scaled fake-term partials.
    return jnp.sum(out)


if __name__ == "__main__":
    key = jax.random.PRNGKey(0)
    k0, k1, k2, k3, k4, k5 = jax.random.split(key, 6)

    # 1) Canonical PatchGAN-style discriminator outputs, NCHW, f32.
    real = jax.random.normal(k0, (2, 4, 16, 16), dtype=jnp.float32)
    fake = jax.random.normal(k1, (2, 4, 16, 16), dtype=jnp.float32)
    out = jax.block_until_ready(hinge_loss(real, fake))
    ref = jax.block_until_ready(_reference_hinge(real, fake))
    assert jnp.allclose(out, ref, rtol=1e-5, atol=1e-5), (out, ref)

    # 2) Multi-tile + ragged-tail masking + skewed grids + mixed dtype
    #    (tiny target_block_bytes forces the tiled path at small shapes).
    real2 = jax.random.normal(k2, (2, 4, 16, 17), dtype=jnp.float32)   # 17 rows
    fake2 = jax.random.normal(k3, (2, 4, 16, 16), dtype=jnp.bfloat16)  # 16 rows
    out2 = jax.block_until_ready(hinge_loss(real2, fake2, target_block_bytes=4096))
    ref2 = jax.block_until_ready(_reference_hinge(real2, fake2))
    assert jnp.allclose(out2, ref2, rtol=1e-5, atol=1e-5), (out2, ref2)

    # 3) Element counts not multiples of 128 (neutral-pad path, <8-row block).
    real3 = jax.random.normal(k4, (5, 7, 11), dtype=jnp.float32)   # 385 elems
    fake3 = jax.random.normal(k5, (2, 200), dtype=jnp.float32)     # 400 elems
    out3 = jax.block_until_ready(hinge_loss(real3, fake3))
    ref3 = jax.block_until_ready(_reference_hinge(real3, fake3))
    assert jnp.allclose(out3, ref3, rtol=1e-5, atol=1e-5), (out3, ref3)

    print("KERNEL_OK")
</pallas_src>

<mosaic_0001>
module attributes {stable_mosaic.version = 11 : i64} {
  func.func @_hinge_kernel(%arg0: i32, %arg1: i32, %arg2: memref<16x128xf32, #tpu.memory_space<vmem>>, %arg3: memref<16x128xf32, #tpu.memory_space<vmem>>, %arg4: memref<8x128xf32, #tpu.memory_space<vmem>>, %arg5: memref<8x128xf32, #tpu.memory_space<vmem>>) attributes {dimension_semantics = [#tpu.dimension_semantics<parallel>, #tpu.dimension_semantics<arbitrary>], iteration_bounds = array<i64: 2, 1>, scalar_prefetch = 0 : i64, scratch_operands = 1 : i64, tpu.core_type = #tpu.core_type<tc>, window_params = [{transform_indices = @transform_0, window_bounds = array<i64: 16, 128>}, {transform_indices = @transform_1, window_bounds = array<i64: 16, 128>}, {transform_indices = @transform_2, window_bounds = array<i64: 8, 128>}]} {
    %c0_i32 = arith.constant 0 : i32
    %0 = arith.cmpi eq, %arg1, %c0_i32 : i32
    %1 = arith.extui %0 : i1 to i32
    %c0_i32_0 = arith.constant 0 : i32
    %2 = arith.cmpi ne, %1, %c0_i32_0 : i32
    scf.if %2 {
      %cst = arith.constant 0.000000e+00 : f32
      %16 = vector.broadcast %cst : f32 to vector<8x128xf32>
      %c0 = arith.constant 0 : index
      %c0_8 = arith.constant 0 : index
      %17 = vector.load %arg5[%c0, %c0_8] : memref<8x128xf32, #tpu.memory_space<vmem>>, vector<8x128xf32>
      tpu.vector_store %arg5[%c0, %c0_8], %16 {strides = array<i32>} : memref<8x128xf32, #tpu.memory_space<vmem>>, vector<8x128xf32>,
    } else {
    }
    %c0_i32_1 = arith.constant 0 : i32
    %3 = arith.cmpi eq, %arg0, %c0_i32_1 : i32
    %c1_i32 = arith.constant 1 : i32
    %4 = arith.cmpi slt, %arg1, %c1_i32 : i32
    %5 = arith.andi %3, %4 : i1
    %6 = arith.extui %5 : i1 to i32
    %c0_i32_2 = arith.constant 0 : i32
    %7 = arith.cmpi ne, %6, %c0_i32_2 : i32
    scf.if %7 {
      %c0 = arith.constant 0 : index
      %c0_8 = arith.constant 0 : index
      %16 = vector.load %arg2[%c0, %c0_8] : memref<16x128xf32, #tpu.memory_space<vmem>>, vector<16x128xf32>
      %cst = arith.constant -1.000000e+00 : f32
      %17 = vector.broadcast %cst : f32 to vector<16x128xf32>
      %18 = arith.mulf %17, %16 : vector<16x128xf32>
      %cst_9 = arith.constant 1.000000e+00 : f32
      %19 = vector.broadcast %cst_9 : f32 to vector<16x128xf32>
      %20 = arith.addf %19, %18 : vector<16x128xf32>
      %cst_10 = arith.constant 0.000000e+00 : f32
      %21 = vector.broadcast %cst_10 : f32 to vector<16x128xf32>
      %22 = arith.maximumf %20, %21 : vector<16x128xf32>
      %c0_11 = arith.constant 0 : index
      %c0_12 = arith.constant 0 : index
      %23 = vector.load %arg5[%c0_11, %c0_12] : memref<8x128xf32, #tpu.memory_space<vmem>>, vector<8x128xf32>
      %24 = vector.shape_cast %22 : vector<16x128xf32> to vector<2x8x128xf32>
      %cst_13 = arith.constant dense<0.000000e+00> : vector<8x128xf32>
      %25 = vector.multi_reduction <add>, %24, %cst_13 [0] : vector<2x8x128xf32> to vector<8x128xf32>
      %26 = arith.addf %23, %25 : vector<8x128xf32>
      %c0_14 = arith.constant 0 : index
      %c0_15 = arith.constant 0 : index
      %27 = vector.load %arg5[%c0_14, %c0_15] : memref<8x128xf32, #tpu.memory_space<vmem>>, vector<8x128xf32>
      tpu.vector_store %arg5[%c0_14, %c0_15], %26 {strides = array<i32>} : memref<8x128xf32, #tpu.memory_space<vmem>>, vector<8x128xf32>,
    } else {
    }
    %c1_i32_3 = arith.constant 1 : i32
    %8 = arith.cmpi eq, %arg0, %c1_i32_3 : i32
    %c1_i32_4 = arith.constant 1 : i32
    %9 = arith.cmpi slt, %arg1, %c1_i32_4 : i32
    %10 = arith.andi %8, %9 : i1
    %11 = arith.extui %10 : i1 to i32
    %c0_i32_5 = arith.constant 0 : i32
    %12 = arith.cmpi ne, %11, %c0_i32_5 : i32
    scf.if %12 {
      %c0 = arith.constant 0 : index
      %c0_8 = arith.constant 0 : index
      %16 = vector.load %arg3[%c0, %c0_8] : memref<16x128xf32, #tpu.memory_space<vmem>>, vector<16x128xf32>
      %cst = arith.constant 1.000000e+00 : f32
      %17 = vector.broadcast %cst : f32 to vector<16x128xf32>
      %18 = arith.mulf %17, %16 : vector<16x128xf32>
      %cst_9 = arith.constant 1.000000e+00 : f32
      %19 = vector.broadcast %cst_9 : f32 to vector<16x128xf32>
      %20 = arith.addf %19, %18 : vector<16x128xf32>
      %cst_10 = arith.constant 0.000000e+00 : f32
      %21 = vector.broadcast %cst_10 : f32 to vector<16x128xf32>
      %22 = arith.maximumf %20, %21 : vector<16x128xf32>
      %c0_11 = arith.constant 0 : index
      %c0_12 = arith.constant 0 : index
      %23 = vector.load %arg5[%c0_11, %c0_12] : memref<8x128xf32, #tpu.memory_space<vmem>>, vector<8x128xf32>
      %24 = vector.shape_cast %22 : vector<16x128xf32> to vector<2x8x128xf32>
      %cst_13 = arith.constant dense<0.000000e+00> : vector<8x128xf32>
      %25 = vector.multi_reduction <add>, %24, %cst_13 [0] : vector<2x8x128xf32> to vector<8x128xf32>
      %26 = arith.addf %23, %25 : vector<8x128xf32>
      %c0_14 = arith.constant 0 : index
      %c0_15 = arith.constant 0 : index
      %27 = vector.load %arg5[%c0_14, %c0_15] : memref<8x128xf32, #tpu.memory_space<vmem>>, vector<8x128xf32>
      tpu.vector_store %arg5[%c0_14, %c0_15], %26 {strides = array<i32>} : memref<8x128xf32, #tpu.memory_space<vmem>>, vector<8x128xf32>,
    } else {
    }
    %c0_i32_6 = arith.constant 0 : i32
    %13 = arith.cmpi eq, %arg1, %c0_i32_6 : i32
    %14 = arith.extui %13 : i1 to i32
    %c0_i32_7 = arith.constant 0 : i32
    %15 = arith.cmpi ne, %14, %c0_i32_7 : i32
    scf.if %15 {
      %c0_i32_8 = arith.constant 0 : i32
      %16 = arith.cmpi eq, %arg0, %c0_i32_8 : i32
      %cst = arith.constant 4.8828125E-4 : f32
      %cst_9 = arith.constant 4.8828125E-4 : f32
      %17 = arith.select %16, %cst, %cst_9 : f32
      %c0 = arith.constant 0 : index
      %c0_10 = arith.constant 0 : index
      %18 = vector.load %arg5[%c0, %c0_10] : memref<8x128xf32, #tpu.memory_space<vmem>>, vector<8x128xf32>
      %19 = vector.broadcast %17 : f32 to vector<8x128xf32>
      %20 = arith.mulf %18, %19 : vector<8x128xf32>
      %c0_11 = arith.constant 0 : index
      %c0_12 = arith.constant 0 : index
      %21 = vector.load %arg4[%c0_11, %c0_12] : memref<8x128xf32, #tpu.memory_space<vmem>>, vector<8x128xf32>
      tpu.vector_store %arg4[%c0_11, %c0_12], %20 {strides = array<i32>} : memref<8x128xf32, #tpu.memory_space<vmem>>, vector<8x128xf32>,
    } else {
    }
    return
  }
  func.func @transform_0(%arg0: i32, %arg1: i32) -> (i32, i32) {
    %c0_i32 = arith.constant 0 : i32
    %0 = arith.cmpi eq, %arg0, %c0_i32 : i32
    %c0_i32_0 = arith.constant 0 : i32
    %1 = arith.minsi %arg1, %c0_i32_0 : i32
    %c0_i32_1 = arith.constant 0 : i32
    %2 = arith.select %0, %1, %c0_i32_1 : i32
    %c0_i32_2 = arith.constant 0 : i32
    %c0_i32_3 = arith.constant 0 : i32
    return %2, %c0_i32_2 : i32, i32
  }
  func.func @transform_1(%arg0: i32, %arg1: i32) -> (i32, i32) {
    %c1_i32 = arith.constant 1 : i32
    %0 = arith.cmpi eq, %arg0, %c1_i32 : i32
    %c0_i32 = arith.constant 0 : i32
    %1 = arith.minsi %arg1, %c0_i32 : i32
    %c0_i32_0 = arith.constant 0 : i32
    %2 = arith.select %0, %1, %c0_i32_0 : i32
    %c0_i32_1 = arith.constant 0 : i32
    %c0_i32_2 = arith.constant 0 : i32
    return %2, %c0_i32_1 : i32, i32
  }
  func.func @transform_2(%arg0: i32, %arg1: i32) -> (i32, i32) {
    %c0_i32 = arith.constant 0 : i32
    %c0_i32_0 = arith.constant 0 : i32
    return %arg0, %c0_i32 : i32, i32
  }
}

</mosaic_0001>

<llo_original>
// kernel: hinge_loss.1
$region0: #{hinge_loss.1}
  #allocation0 [shape = 'u32[]', space=smem, size = 0x4, offset = 0x4, fixed_abs, tag = 'smem constant byte address 0x4 - core index']
  #allocation1 [shape = 'u32[144,128]{1,0:T(1,128)}', space=vmem, size = 0x12000, scoped, tag = 'internal scratch']
  #allocation2 [shape = 'f32[8,128]{1,0:T(8,128)}', space=vmem, size = 0x1000, scoped, tag = 'scratch operand']
  %s0 = inlined_call_operand.vmem [shape: f32[16,128], index: 0, kind: input, shape index: {}]
  %s1 = inlined_call_operand.vmem [shape: f32[16,128], index: 1, kind: input, shape index: {}]
  %s2 = inlined_call_operand.vmem [shape: f32[16,128], index: 2, kind: output, shape index: {}]
  %s3 = sld [smem:[#allocation0]]
  $region57: #{hinge_loss.1} parent=0
    _
  %s5 = ssub.s32 1, %s3
  %s6 = scalar_select 0, %s5, %s3
  loop: start=0, step=1, limit=4
  $region2: #{hinge_loss.1} parent=0 // loop_pre_header
    _
  $region3: #{hinge_loss.1} parent=0 // loop_header
    %s8 = sphi 0, %s12
    %p9 = scmp.ge.s32.totalorder %s8, 4
    %s15 = sphi 0, %s27
    %s16 = sphi 0, %s23
    %s17 = sphi 0, %s15
    %s18 = sphi 0, %s16
    %s19 = sphi 0, %s17
    %s20 = sphi 0, %s18
    %s38 = sphi 0, %s40
    %s41 = sphi 0, %s38
    %s42 = sphi 0, %s41
    %s58 = sphi 0, %s42
    %s72 = sphi 0, %s74
    %s75 = sphi 0, %s72
    %s76 = sphi 0, %s75
    %s92 = sphi 0, %s76
    %s98 = sphi 0, %s100
    %s101 = sphi 0, %s98
    %s102 = sphi 0, %s101
    %s118 = sphi 0, %s102
  $region4: #{hinge_loss.1} parent=0 // loop_header_branch
    %11 = sbr.rel (%p9) target = $region8
  $region5: #{hinge_loss.1} parent=0 // loop_body
    %s13 = ssub.s32 %s8, 1
    %s14 = ssub.s32 %s8, 2
    %s21 = sadd.s32 1, %s16
    %p22 = scmp.ge.s32.totalorder %s21, 1
    %s23 = scalar_select %p22, 0, %s21
    %s24 = sadd.s32 1, %s15
    %s25 = scalar_select %p22, %s24, %s15
    %p26 = scmp.ge.s32.totalorder %s25, 2
    %s27 = scalar_select %p26, 0, %s25
    %p28 = scmp.eq.s32.totalorder %s15, 0
    %p29 = scmp.lt.s32.totalorder %s16, 0
    %s30 = scalar_select %p29, %s16, 0
    %s31 = scalar_select %p28, %s30, 0
    %p32 = scmp.eq.s32.totalorder %s27, 0
    %p33 = scmp.lt.s32.totalorder %s23, 0
    %s34 = scalar_select %p33, %s23, 0
    %s35 = scalar_select %p32, %s34, 0
    %s36 = ssub.s32 %s31, %s35
    %p37 = scmp.eq.s32.totalorder %s36, 0
    %s39 = sadd.s32 %s38, 1
    %s40 = scalar_select %p37, %s38, %s39
    %p43 = pneg %p37
    %p44 = scmp.eq.s32.totalorder %s8, 1
    %p45 = por %p43, %p44
    %p46 = scmp.ne.s32.totalorder %s38, %s41
    %p47 = scmp.eq.s32.totalorder %s8, 0
    %p48 = por %p46, %p47
    %p49 = scmp.ne.s32.totalorder %s38, %s41
    %p50 = scmp.eq.s32.totalorder %s13, 1
    %p51 = por %p49, %p50
    %p52 = scmp.ne.s32.totalorder %s41, %s42
    %p53 = scmp.eq.s32.totalorder %s13, 0
    %p54 = por %p52, %p53
    %p55 = scmp.ne.s32.totalorder %s41, %s42
    %p56 = scmp.eq.s32.totalorder %s14, 1
    %p57 = por %p55, %p56
    %p59 = scmp.ne.s32.totalorder %s42, %s58
    %p60 = scmp.eq.s32.totalorder %s14, 0
    %p61 = por %p59, %p60
    %p62 = scmp.eq.s32.totalorder %s15, 1
    %p63 = scmp.lt.s32.totalorder %s16, 0
    %s64 = scalar_select %p63, %s16, 0
    %s65 = scalar_select %p62, %s64, 0
    %p66 = scmp.eq.s32.totalorder %s27, 1
    %p67 = scmp.lt.s32.totalorder %s23, 0
    %s68 = scalar_select %p67, %s23, 0
    %s69 = scalar_select %p66, %s68, 0
    %s70 = ssub.s32 %s65, %s69
    %p71 = scmp.eq.s32.totalorder %s70, 0
    %s73 = sadd.s32 %s72, 1
    %s74 = scalar_select %p71, %s72, %s73
    %p77 = pneg %p71
    %p78 = scmp.eq.s32.totalorder %s8, 1
    %p79 = por %p77, %p78
    %p80 = scmp.ne.s32.totalorder %s72, %s75
    %p81 = scmp.eq.s32.totalorder %s8, 0
    %p82 = por %p80, %p81
    %p83 = scmp.ne.s32.totalorder %s72, %s75
    %p84 = scmp.eq.s32.totalorder %s13, 1
    %p85 = por %p83, %p84
    %p86 = scmp.ne.s32.totalorder %s75, %s76
    %p87 = scmp.eq.s32.totalorder %s13, 0
    %p88 = por %p86, %p87
    %p89 = scmp.ne.s32.totalorder %s75, %s76
    %p90 = scmp.eq.s32.totalorder %s14, 1
    %p91 = por %p89, %p90
    %p93 = scmp.ne.s32.totalorder %s76, %s92
    %p94 = scmp.eq.s32.totalorder %s14, 0
    %p95 = por %p93, %p94
    %s96 = ssub.s32 %s15, %s27
    %p97 = scmp.eq.s32.totalorder %s96, 0
    %s99 = sadd.s32 %s98, 1
    %s100 = scalar_select %p97, %s98, %s99
    %p103 = pneg %p97
    %p104 = scmp.eq.s32.totalorder %s8, 1
    %p105 = por %p103, %p104
    %p106 = scmp.ne.s32.totalorder %s98, %s101
    %p107 = scmp.eq.s32.totalorder %s8, 0
    %p108 = por %p106, %p107
    %p109 = scmp.ne.s32.totalorder %s98, %s101
    %p110 = scmp.eq.s32.totalorder %s13, 1
    %p111 = por %p109, %p110
    %p112 = scmp.ne.s32.totalorder %s101, %s102
    %p113 = scmp.eq.s32.totalorder %s13, 0
    %p114 = por %p112, %p113
    %p115 = scmp.ne.s32.totalorder %s101, %s102
    %p116 = scmp.eq.s32.totalorder %s14, 1
    %p117 = por %p115, %p116
    %p119 = scmp.ne.s32.totalorder %s102, %s118
    %p120 = scmp.eq.s32.totalorder %s14, 0
    %p121 = por %p119, %p120
    %p122 = scmp.le.s32.totalorder 1, %s8
    %p123 = scmp.lt.s32.totalorder %s8, 3
    %p124 = pnand %p122, %p123
    %p125 = pneg %p124
    // Predicated region
    $region9: #{hinge_loss.1} parent=5 // pred_check
      _
    $region10: #{hinge_loss.1} parent=5 // pred_check_branch
      %127 = sbr.rel (%p124) target = $region12
    $region11: #{hinge_loss.1} parent=5 // pred_region
      %s128 = ssub.s32 %s8, 1
    $region12: #{hinge_loss.1} parent=5 // pred_fallthru
      _
    %p129 = scmp.lt.s32.totalorder %s8, 2
    // Predicated region
    $region13: #{hinge_loss.1} parent=5 // pred_check
      %p130 = pneg %p129
    $region14: #{hinge_loss.1} parent=5 // pred_check_branch
      %132 = sbr.rel (%p130) target = $region16
    $region15: #{hinge_loss.1} parent=5 // pred_region
      // Predicated region
      $region17: #{hinge_loss.1} parent=15 // pred_check
        %p133 = pneg %p48
      $region18: #{hinge_loss.1} parent=15 // pred_check_branch
        %135 = sbr.rel (%p133) target = $region20
      $region19: #{hinge_loss.1} parent=15 // pred_region
        %p136 = scmp.eq.s32.totalorder %s15, 0
        %p137 = scmp.lt.s32.totalorder %s16, 0
        %s138 = scalar_select %p137, %s16, 0
        %s139 = scalar_select %p136, %s138, 0
        %s140 = smul.u32 2, %s139
        %p141 = scmp.lt.s32.totalorder %s140, 1
        %s142 = scalar_select %p141, %s140, 1
        %s143 = smul.addr %s142, 8
        %s144 = scalar_lea.vmem %s0, %s143
        %p145 = scmp.eq.s32.totalorder %s15, 0
        %p146 = scmp.lt.s32.totalorder %s16, 0
        %s147 = scalar_select %p146, %s16, 0
        %s148 = scalar_select %p145, %s147, 0
        %s149 = smul.u32 2, %s148
      $region20: #{hinge_loss.1} parent=15 // pred_fallthru
        _
      // Predicated region
      $region21: #{hinge_loss.1} parent=15 // pred_check
        %p150 = pneg %p82
      $region22: #{hinge_loss.1} parent=15 // pred_check_branch
        %152 = sbr.rel (%p150) target = $region24
      $region23: #{hinge_loss.1} parent=15 // pred_region
        %p153 = scmp.eq.s32.totalorder %s15, 1
        %p154 = scmp.lt.s32.totalorder %s16, 0
        %s155 = scalar_select %p154, %s16, 0
        %s156 = scalar_select %p153, %s155, 0
        %s157 = smul.u32 2, %s156
        %p158 = scmp.lt.s32.totalorder %s157, 1
        %s159 = scalar_select %p158, %s157, 1
        %s160 = smul.addr %s159, 8
        %s161 = scalar_lea.vmem %s1, %s160
        %p162 = scmp.eq.s32.totalorder %s15, 1
        %p163 = scmp.lt.s32.totalorder %s16, 0
        %s164 = scalar_select %p163, %s16, 0
        %s165 = scalar_select %p162, %s164, 0
        %s166 = smul.u32 2, %s165
      $region24: #{hinge_loss.1} parent=15 // pred_fallthru
        _
    $region16: #{hinge_loss.1} parent=5 // pred_fallthru
      _
    %p167 = scmp.le.s32.totalorder 1, %s8
    %p168 = scmp.lt.s32.totalorder %s8, 3
    %p169 = pnand %p167, %p168
    %p170 = pneg %p169
    // Predicated region
    $region25: #{hinge_loss.1} parent=5 // pred_check
      _
    $region26: #{hinge_loss.1} parent=5 // pred_check_branch
      %172 = sbr.rel (%p169) target = $region28
    $region27: #{hinge_loss.1} parent=5 // pred_region
      %s173 = ssub.s32 %s8, 1
      %p174 = scmp.eq.s32.totalorder %s17, 0
      %p175 = scmp.lt.s32.totalorder %s18, 0
      %s176 = scalar_select %p175, %s18, 0
      %s177 = scalar_select %p174, %s176, 0
      %s178 = smul.u32 2, %s177
      %p179 = scmp.lt.s32.totalorder %s178, 1
      %s180 = scalar_select %p179, %s178, 1
      %s181 = smul.addr %s180, 8
      %s182 = scalar_lea.vmem %s0, %s181
      %p183 = pneg %p54
      %p184 = pneg %p51
      %p185 = scmp.eq.s32.totalorder %s17, 1
      %p186 = scmp.lt.s32.totalorder %s18, 0
      %s187 = scalar_select %p186, %s18, 0
      %s188 = scalar_select %p185, %s187, 0
      %s189 = smul.u32 2, %s188
      %p190 = scmp.lt.s32.totalorder %s189, 1
      %s191 = scalar_select %p190, %s189, 1
      %s192 = smul.addr %s191, 8
      %s193 = scalar_lea.vmem %s1, %s192
      %p194 = pneg %p88
      %p195 = pneg %p85
      %p196 = pneg %p114
      %p197 = pneg %p111
      %p198 = scmp.lt.s32.totalorder %s17, 1
      %s199 = scalar_select %p198, %s17, 1
      %s200 = smul.addr %s199, 8
      %s201 = scalar_lea.vmem %s2, %s200
      %p202 = scmp.eq.s32.totalorder %s17, 0
      %p203 = scmp.lt.s32.totalorder %s18, 0
      %s204 = scalar_select %p203, %s18, 0
      %s205 = scalar_select %p202, %s204, 0
      %s206 = smul.u32 2, %s205
      %p207 = scmp.lt.s32.totalorder %s206, 1
      %s208 = scalar_select %p207, %s206, 1
      %s209 = smul.addr %s208, 8
      %s210 = scalar_lea.vmem %s0, %s209
      %p211 = scmp.eq.s32.totalorder %s17, 0
      %p212 = scmp.lt.s32.totalorder %s18, 0
      %s213 = scalar_select %p212, %s18, 0
      %s214 = scalar_select %p211, %s213, 0
      %s215 = smul.u32 2, %s214
      %p216 = scmp.eq.s32.totalorder %s17, 1
      %p217 = scmp.lt.s32.totalorder %s18, 0
      %s218 = scalar_select %p217, %s18, 0
      %s219 = scalar_select %p216, %s218, 0
      %s220 = smul.u32 2, %s219
      %p221 = scmp.lt.s32.totalorder %s220, 1
      %s222 = scalar_select %p221, %s220, 1
      %s223 = smul.addr %s222, 8
      %s224 = scalar_lea.vmem %s1, %s223
      %p225 = scmp.eq.s32.totalorder %s17, 1
      %p226 = scmp.lt.s32.totalorder %s18, 0
      %s227 = scalar_select %p226, %s18, 0
      %s228 = scalar_select %p225, %s227, 0
      %s229 = smul.u32 2, %s228
      %p230 = scmp.lt.s32.totalorder %s17, 1
      %s231 = scalar_select %p230, %s17, 1
      %s232 = smul.addr %s231, 8
      %s233 = scalar_lea.vmem %s2, %s232
      %p234 = scmp.eq.s32.totalorder %s18, 0
      // Predicated region
      $region29: #{hinge_loss.1} parent=27 // pred_check
        %p235 = pneg %p234
      $region30: #{hinge_loss.1} parent=27 // pred_check_branch
        %237 = sbr.rel (%p235) target = $region32
      $region31: #{hinge_loss.1} parent=27 // pred_region
        %238 = vst [vmem:[#allocation2] sm:$0xff] 0.0
      $region32: #{hinge_loss.1} parent=27 // pred_fallthru
        _
      %p239 = scmp.eq.s32.totalorder %s17, 0
      %p240 = scmp.lt.s32.totalorder %s18, 1
      %p241 = pnand %p239, %p240
      %p242 = pneg %p241
      // Predicated region
      $region33: #{hinge_loss.1} parent=27 // pred_check
        _
      $region34: #{hinge_loss.1} parent=27 // pred_check_branch
        %244 = sbr.rel (%p241) target = $region36
      $region35: #{hinge_loss.1} parent=27 // pred_region
        %v245 = vld [vmem:[%s210] sm:$0xff]
        %v246 = vld [vmem:[%s210 + $0x8] sm:$0xff]
        %v247 = vmul.f32 %v245, -1.0
        %v248 = vmul.f32 %v246, -1.0
        %v249 = vadd.f32 %v247, 1.0
        %v250 = vadd.f32 %v248, 1.0
        %v251 = vmax.f32 %v249, 0.0
        %v252 = vmax.f32 %v250, 0.0
        %v253 = vld [vmem:[#allocation2] sm:$0xff]
        %v254 = vadd.f32 %v251, %v252
        %v255 = vadd.f32 %v253, %v254
        %256 = vst [vmem:[#allocation2] sm:$0xff] %v255
      $region36: #{hinge_loss.1} parent=27 // pred_fallthru
        _
      %p257 = scmp.eq.s32.totalorder %s17, 1
      %p258 = pnand %p257, %p240
      %p259 = pneg %p258
      // Predicated region
      $region37: #{hinge_loss.1} parent=27 // pred_check
        _
      $region38: #{hinge_loss.1} parent=27 // pred_check_branch
        %261 = sbr.rel (%p258) target = $region40
      $region39: #{hinge_loss.1} parent=27 // pred_region
        %v262 = vld [vmem:[%s224] sm:$0xff]
        %v263 = vld [vmem:[%s224 + $0x8] sm:$0xff]
        %v264 = vadd.f32 %v262, 1.0
        %v265 = vadd.f32 %v263, 1.0
        %v266 = vmax.f32 %v264, 0.0
        %v267 = vmax.f32 %v265, 0.0
        %v268 = vld [vmem:[#allocation2] sm:$0xff]
        %v269 = vadd.f32 %v266, %v267
        %v270 = vadd.f32 %v268, %v269
        %271 = vst [vmem:[#allocation2] sm:$0xff] %v270
      $region40: #{hinge_loss.1} parent=27 // pred_fallthru
        _
      // Predicated region
      $region41: #{hinge_loss.1} parent=27 // pred_check
        %p272 = pneg %p234
      $region42: #{hinge_loss.1} parent=27 // pred_check_branch
        %274 = sbr.rel (%p272) target = $region44
      $region43: #{hinge_loss.1} parent=27 // pred_region
        %v275 = vld [vmem:[#allocation2] sm:$0xff]
        %v276 = vmul.f32 %v275, 0.00048828125
        %277 = vst [vmem:[%s233] sm:$0xff] %v276
      $region44: #{hinge_loss.1} parent=27 // pred_fallthru
        _
      %p278 = scmp.lt.s32.totalorder %s17, 1
      %s279 = scalar_select %p278, %s17, 1
      %s280 = smul.addr %s279, 8
      %s281 = scalar_lea.vmem %s2, %s280
      // Predicated region
      $region45: #{hinge_loss.1} parent=27 // pred_check
        %p282 = pneg %p111
      $region46: #{hinge_loss.1} parent=27 // pred_check_branch
        %284 = sbr.rel (%p282) target = $region48
      $region47: #{hinge_loss.1} parent=27 // pred_region
        _
      $region48: #{hinge_loss.1} parent=27 // pred_fallthru
        _
    $region28: #{hinge_loss.1} parent=5 // pred_fallthru
      _
    %p285 = scmp.le.s32.totalorder 2, %s8
    // Predicated region
    $region49: #{hinge_loss.1} parent=5 // pred_check
      %p286 = pneg %p285
    $region50: #{hinge_loss.1} parent=5 // pred_check_branch
      %288 = sbr.rel (%p286) target = $region52
    $region51: #{hinge_loss.1} parent=5 // pred_region
      %s289 = ssub.s32 %s8, 2
      // Predicated region
      $region53: #{hinge_loss.1} parent=51 // pred_check
        %p290 = pneg %p117
      $region54: #{hinge_loss.1} parent=51 // pred_check_branch
        %292 = sbr.rel (%p290) target = $region56
      $region55: #{hinge_loss.1} parent=51 // pred_region
        %p293 = scmp.lt.s32.totalorder %s19, 1
        %s294 = scalar_select %p293, %s19, 1
        %s295 = smul.addr %s294, 8
        %s296 = scalar_lea.vmem %s2, %s295
      $region56: #{hinge_loss.1} parent=51 // pred_fallthru
        _
    $region52: #{hinge_loss.1} parent=5 // pred_fallthru
      _
  $region6: #{hinge_loss.1} parent=0 // loop_footer
    %s12 = sadd.s32 1, %s8
  $region7: #{hinge_loss.1} parent=0 // loop_footer_branch
    %7 = sbr.rel target = $region3
  $region8: #{hinge_loss.1} parent=0 // loop_exit
    _

</llo_original>
